<compile_context>
chip_gen: v5e
topology: v5e:2x2
jax: 0.10.0
libtpu: 0.0.40
codegen_flags: <defaults>
</compile_context>

<pallas_src>
import functools

import jax
import jax.numpy as jnp
from jax.experimental import pallas as pl
from jax.experimental.pallas import tpu as pltpu


def _round_up(n: int, m: int) -> int:
    return ((n + m - 1) // m) * m


def _mlp_kernel(x_ref, w_pre_ref, b_pre_ref, wh_ref, bh_ref, w_post_ref, b_post_ref,
                out_ref, *, hidden_layers: int, activation, out_dim: int):
    # layer_pre: Linear + leaky_relu (default negative_slope = 0.01)
    # bf16 MXU feeds, f32 accumulation; bias add + activations in f32.
    h = jnp.dot(x_ref[...], w_pre_ref[...], preferred_element_type=jnp.float32)
    h = h + b_pre_ref[...]
    h = jnp.where(h > 0, h, 0.01 * h)

    # hidden layers: (Linear -> ReLU) x hidden_layers (statically unrolled)
    for l in range(hidden_layers):
        h = jnp.dot(h.astype(jnp.bfloat16), wh_ref[l],
                    preferred_element_type=jnp.float32)
        h = h + bh_ref[l]
        h = jnp.maximum(h, 0.0)

    # layer_post
    y = jnp.dot(h.astype(jnp.bfloat16), w_post_ref[...],
                preferred_element_type=jnp.float32)
    y = y + b_post_ref[...]

    # output activation (selected at trace time, mirrors the torch branches)
    if activation is None:
        out = y
    elif activation == 'relu':
        out = jnp.maximum(y, 0.0)
    elif activation == 'softmax':
        # mask lane-padding columns so they don't contribute to the denominator
        if out_dim < y.shape[-1]:
            col = jax.lax.broadcasted_iota(jnp.int32, y.shape, 1)
            y = jnp.where(col < out_dim, y, -jnp.inf)
        m = jnp.max(y, axis=-1, keepdims=True)
        e = jnp.exp(y - m)
        s = jnp.sum(e, axis=-1, keepdims=True)
        out = e * pl.reciprocal(s, approx=True)
    elif activation == 'tanh':
        out = jnp.tanh(y)
    elif activation == 'softplus':
        # PyTorch softplus: y if y > 20 (threshold) else log(1 + exp(y))
        out = jnp.where(y > 20.0, y, jnp.log1p(jnp.exp(jnp.minimum(y, 20.0))))
    else:
        raise ValueError(f"unknown activation {activation!r}")

    out_ref[...] = out.astype(out_ref.dtype)


def mlp_forward(x, params, *, hidden_layers: int, activation, tb: int = 256):
    """Full MLP forward pass in a single Pallas kernel, tiled over batch.

    x: (B, D) float32. params: f32 master weights; cast/padded here.
    """
    B, D = x.shape
    H = params['w_pre'].shape[1]
    O = params['w_post'].shape[1]

    # Lane-pad feature dims to 128; sublane-pad / tile the batch.
    D_pad = _round_up(D, 128)
    H_pad = _round_up(H, 128)
    O_pad = _round_up(O, 128)
    tb_eff = min(tb, _round_up(B, 8))           # whole batch in one step if small
    tb_eff = _round_up(tb_eff, 8)
    B_pad = _round_up(B, tb_eff)

    bf16, f32 = jnp.bfloat16, jnp.float32

    def pad_to(a, shape):
        pads = [(0, t - s) for s, t in zip(a.shape, shape)]
        if all(p == (0, 0) for p in pads):
            return a
        return jnp.pad(a, pads)

    L = hidden_layers
    L_blk = max(L, 1)

    x_p = pad_to(x.astype(bf16), (B_pad, D_pad))
    w_pre = pad_to(params['w_pre'].astype(bf16), (D_pad, H_pad))
    b_pre = pad_to(params['b_pre'].astype(f32), (1, H_pad))
    if L > 0:
        wh = pad_to(params['wh'].astype(bf16), (L, H_pad, H_pad))
        bh = pad_to(params['bh'].astype(f32), (L, 1, H_pad))
    else:  # dummy single (zero) layer; kernel's static loop never reads it
        wh = jnp.zeros((1, H_pad, H_pad), bf16)
        bh = jnp.zeros((1, 1, H_pad), f32)
    w_post = pad_to(params['w_post'].astype(bf16), (H_pad, O_pad))
    b_post = pad_to(params['b_post'].astype(f32), (1, O_pad))

    kernel = functools.partial(_mlp_kernel, hidden_layers=L,
                               activation=activation, out_dim=O)

    out = pl.pallas_call(
        kernel,
        out_shape=jax.ShapeDtypeStruct((B_pad, O_pad), f32),
        grid=(B_pad // tb_eff,),
        in_specs=[
            pl.BlockSpec((tb_eff, D_pad), lambda i: (i, 0)),             # x tile (bf16)
            pl.BlockSpec((D_pad, H_pad), lambda i: (0, 0)),              # w_pre (bf16)
            pl.BlockSpec((1, H_pad), lambda i: (0, 0)),                  # b_pre (f32)
            pl.BlockSpec((L_blk, H_pad, H_pad), lambda i: (0, 0, 0)),    # stacked hidden W (bf16)
            pl.BlockSpec((L_blk, 1, H_pad), lambda i: (0, 0, 0)),        # stacked hidden b (f32)
            pl.BlockSpec((H_pad, O_pad), lambda i: (0, 0)),              # w_post (bf16)
            pl.BlockSpec((1, O_pad), lambda i: (0, 0)),                  # b_post (f32)
        ],
        out_specs=pl.BlockSpec((tb_eff, O_pad), lambda i: (i, 0)),       # lane-dense output
        compiler_params=pltpu.CompilerParams(
            dimension_semantics=("parallel",)),
    )(x_p, w_pre, b_pre, wh, bh, w_post, b_post)

    return out[:B, :O]


def init_params(key, input_dim, output_dim, hidden_size, hidden_layers):
    """Deterministic init mimicking torch.nn.Linear (uniform +-1/sqrt(fan_in)), f32 master copy."""
    def linear(k, fan_in, fan_out):
        kw, kb = jax.random.split(k)
        bound = 1.0 / jnp.sqrt(fan_in)
        w = jax.random.uniform(kw, (fan_in, fan_out), jnp.float32, -bound, bound)
        b = jax.random.uniform(kb, (1, fan_out), jnp.float32, -bound, bound)
        return w, b

    keys = jax.random.split(key, hidden_layers + 2)
    w_pre, b_pre = linear(keys[0], input_dim, hidden_size)
    wh, bh = [], []
    for l in range(hidden_layers):
        w, b = linear(keys[1 + l], hidden_size, hidden_size)
        wh.append(w)
        bh.append(b[None])  # (1, 1, H)
    w_post, b_post = linear(keys[-1], hidden_size, output_dim)
    if hidden_layers > 0:
        wh_s = jnp.stack(wh, axis=0)            # (L, H, H)
        bh_s = jnp.concatenate(bh, axis=0)      # (L, 1, H)
    else:
        wh_s = jnp.zeros((0, hidden_size, hidden_size), jnp.float32)
        bh_s = jnp.zeros((0, 1, hidden_size), jnp.float32)
    return {'w_pre': w_pre, 'b_pre': b_pre, 'wh': wh_s, 'bh': bh_s,
            'w_post': w_post, 'b_post': b_post}


def mlp_reference(x, params, *, hidden_layers, activation):
    """Pure-JAX reference using the same bf16-feed / f32-accumulate recipe."""
    bf16 = jnp.bfloat16
    h = jnp.dot(x.astype(bf16), params['w_pre'].astype(bf16),
                preferred_element_type=jnp.float32) + params['b_pre']
    h = jnp.where(h > 0, h, 0.01 * h)
    for l in range(hidden_layers):
        h = jnp.dot(h.astype(bf16), params['wh'][l].astype(bf16),
                    preferred_element_type=jnp.float32) + params['bh'][l]
        h = jnp.maximum(h, 0.0)
    y = jnp.dot(h.astype(bf16), params['w_post'].astype(bf16),
                preferred_element_type=jnp.float32) + params['b_post']
    if activation is None:
        return y
    if activation == 'relu':
        return jnp.maximum(y, 0.0)
    if activation == 'softmax':
        return jax.nn.softmax(y, axis=-1)
    if activation == 'tanh':
        return jnp.tanh(y)
    if activation == 'softplus':
        return jax.nn.softplus(y)
    raise ValueError(activation)


if __name__ == "__main__":
    # Small SAC-style config: state_dim=16 -> hidden 32 x (2 hidden layers) -> action_dim=8
    batch, input_dim, output_dim = 8, 16, 8
    hidden_size, hidden_layers = 32, 2

    key = jax.random.PRNGKey(0)
    kx, kp = jax.random.split(key)
    x = jax.random.normal(kx, (batch, input_dim), jnp.float32)
    params = init_params(kp, input_dim, output_dim, hidden_size, hidden_layers)

    ok = True
    for activation in ('tanh', 'softmax', 'softplus', None):
        out = mlp_forward(x, params, hidden_layers=hidden_layers, activation=activation)
        out = jax.block_until_ready(out)
        ref = mlp_reference(x, params, hidden_layers=hidden_layers, activation=activation)
        assert out.shape == (batch, output_dim)
        if not jnp.allclose(out, ref, atol=2e-2, rtol=2e-2):
            ok = False
            print(f"mismatch for activation={activation!r}: "
                  f"max abs err = {float(jnp.max(jnp.abs(out - ref)))}")

    if ok:
        print("KERNEL_OK")
</pallas_src>

<mosaic_0001>
module attributes {stable_mosaic.version = 11 : i64} {
  func.func @_mlp_kernel(%arg0: i32, %arg1: memref<8x128xbf16, #tpu.memory_space<vmem>>, %arg2: memref<128x128xbf16, #tpu.memory_space<vmem>>, %arg3: memref<1x128xf32, #tpu.memory_space<vmem>>, %arg4: memref<2x128x128xbf16, #tpu.memory_space<vmem>>, %arg5: memref<2x1x128xf32, #tpu.memory_space<vmem>>, %arg6: memref<128x128xbf16, #tpu.memory_space<vmem>>, %arg7: memref<1x128xf32, #tpu.memory_space<vmem>>, %arg8: memref<8x128xf32, #tpu.memory_space<vmem>>) attributes {dimension_semantics = [#tpu.dimension_semantics<parallel>], iteration_bounds = array<i64: 1>, scalar_prefetch = 0 : i64, scratch_operands = 0 : i64, tpu.core_type = #tpu.core_type<tc>, window_params = [{transform_indices = @transform_0, window_bounds = array<i64: 8, 128>}, {pipeline_mode = #tpu.pipeline_mode<synchronous>, transform_indices = @transform_1, window_bounds = array<i64: 128, 128>}, {pipeline_mode = #tpu.pipeline_mode<synchronous>, transform_indices = @transform_2, window_bounds = array<i64: 1, 128>}, {pipeline_mode = #tpu.pipeline_mode<synchronous>, transform_indices = @transform_3, window_bounds = array<i64: 2, 128, 128>}, {pipeline_mode = #tpu.pipeline_mode<synchronous>, transform_indices = @transform_4, window_bounds = array<i64: 2, 1, 128>}, {pipeline_mode = #tpu.pipeline_mode<synchronous>, transform_indices = @transform_5, window_bounds = array<i64: 128, 128>}, {pipeline_mode = #tpu.pipeline_mode<synchronous>, transform_indices = @transform_6, window_bounds = array<i64: 1, 128>}, {transform_indices = @transform_7, window_bounds = array<i64: 8, 128>}]} {
    %c0 = arith.constant 0 : index
    %c0_0 = arith.constant 0 : index
    %0 = vector.load %arg1[%c0, %c0_0] : memref<8x128xbf16, #tpu.memory_space<vmem>>, vector<8x128xbf16>
    %c0_1 = arith.constant 0 : index
    %c0_2 = arith.constant 0 : index
    %1 = vector.load %arg2[%c0_1, %c0_2] : memref<128x128xbf16, #tpu.memory_space<vmem>>, vector<128x128xbf16>
    %cst = arith.constant dense<0.000000e+00> : vector<8x128xf32>
    %2 = tpu.matmul %0, %1, %cst {dimension_numbers = #tpu.dot_dimension_numbers<[1], [0], [0], [1], [0, 0, 1, 1], [], []>} : vector<8x128xbf16>, vector<128x128xbf16>, vector<8x128xf32> -> vector<8x128xf32>
    %c0_3 = arith.constant 0 : index
    %c0_4 = arith.constant 0 : index
    %3 = vector.load %arg3[%c0_3, %c0_4] : memref<1x128xf32, #tpu.memory_space<vmem>>, vector<1x128xf32>
    %4 = vector.broadcast %3 : vector<1x128xf32> to vector<8x128xf32>
    %5 = arith.addf %2, %4 : vector<8x128xf32>
    %cst_5 = arith.constant 0.000000e+00 : f32
    %6 = vector.broadcast %cst_5 : f32 to vector<8x128xf32>
    %7 = arith.cmpf ogt, %5, %6 : vector<8x128xf32>
    %cst_6 = arith.constant 0.00999999977 : f32
    %8 = vector.broadcast %cst_6 : f32 to vector<8x128xf32>
    %9 = arith.mulf %8, %5 : vector<8x128xf32>
    %10 = arith.select %7, %5, %9 : vector<8x128xi1>, vector<8x128xf32>
    %11 = arith.truncf %10 : vector<8x128xf32> to vector<8x128xbf16>
    %c0_7 = arith.constant 0 : index
    %c0_8 = arith.constant 0 : index
    %c0_9 = arith.constant 0 : index
    %12 = vector.load %arg4[%c0_7, %c0_8, %c0_9] : memref<2x128x128xbf16, #tpu.memory_space<vmem>>, vector<1x128x128xbf16>
    %13 = vector.shape_cast %12 : vector<1x128x128xbf16> to vector<128x128xbf16>
    %cst_10 = arith.constant dense<0.000000e+00> : vector<8x128xf32>
    %14 = tpu.matmul %11, %13, %cst_10 {dimension_numbers = #tpu.dot_dimension_numbers<[1], [0], [0], [1], [0, 0, 1, 1], [], []>} : vector<8x128xbf16>, vector<128x128xbf16>, vector<8x128xf32> -> vector<8x128xf32>
    %c0_11 = arith.constant 0 : index
    %c0_12 = arith.constant 0 : index
    %c0_13 = arith.constant 0 : index
    %15 = vector.load %arg5[%c0_11, %c0_12, %c0_13] : memref<2x1x128xf32, #tpu.memory_space<vmem>>, vector<1x1x128xf32>
    %16 = vector.shape_cast %15 : vector<1x1x128xf32> to vector<1x128xf32>
    %17 = vector.broadcast %16 : vector<1x128xf32> to vector<8x128xf32>
    %18 = arith.addf %14, %17 : vector<8x128xf32>
    %cst_14 = arith.constant 0.000000e+00 : f32
    %19 = vector.broadcast %cst_14 : f32 to vector<8x128xf32>
    %20 = arith.maximumf %18, %19 : vector<8x128xf32>
    %21 = arith.truncf %20 : vector<8x128xf32> to vector<8x128xbf16>
    %c1 = arith.constant 1 : index
    %c0_15 = arith.constant 0 : index
    %c0_16 = arith.constant 0 : index
    %22 = vector.load %arg4[%c1, %c0_15, %c0_16] : memref<2x128x128xbf16, #tpu.memory_space<vmem>>, vector<1x128x128xbf16>
    %23 = vector.shape_cast %22 : vector<1x128x128xbf16> to vector<128x128xbf16>
    %cst_17 = arith.constant dense<0.000000e+00> : vector<8x128xf32>
    %24 = tpu.matmul %21, %23, %cst_17 {dimension_numbers = #tpu.dot_dimension_numbers<[1], [0], [0], [1], [0, 0, 1, 1], [], []>} : vector<8x128xbf16>, vector<128x128xbf16>, vector<8x128xf32> -> vector<8x128xf32>
    %c1_18 = arith.constant 1 : index
    %c0_19 = arith.constant 0 : index
    %c0_20 = arith.constant 0 : index
    %25 = vector.load %arg5[%c1_18, %c0_19, %c0_20] : memref<2x1x128xf32, #tpu.memory_space<vmem>>, vector<1x1x128xf32>
    %26 = vector.shape_cast %25 : vector<1x1x128xf32> to vector<1x128xf32>
    %27 = vector.broadcast %26 : vector<1x128xf32> to vector<8x128xf32>
    %28 = arith.addf %24, %27 : vector<8x128xf32>
    %cst_21 = arith.constant 0.000000e+00 : f32
    %29 = vector.broadcast %cst_21 : f32 to vector<8x128xf32>
    %30 = arith.maximumf %28, %29 : vector<8x128xf32>
    %31 = arith.truncf %30 : vector<8x128xf32> to vector<8x128xbf16>
    %c0_22 = arith.constant 0 : index
    %c0_23 = arith.constant 0 : index
    %32 = vector.load %arg6[%c0_22, %c0_23] : memref<128x128xbf16, #tpu.memory_space<vmem>>, vector<128x128xbf16>
    %cst_24 = arith.constant dense<0.000000e+00> : vector<8x128xf32>
    %33 = tpu.matmul %31, %32, %cst_24 {dimension_numbers = #tpu.dot_dimension_numbers<[1], [0], [0], [1], [0, 0, 1, 1], [], []>} : vector<8x128xbf16>, vector<128x128xbf16>, vector<8x128xf32> -> vector<8x128xf32>
    %c0_25 = arith.constant 0 : index
    %c0_26 = arith.constant 0 : index
    %34 = vector.load %arg7[%c0_25, %c0_26] : memref<1x128xf32, #tpu.memory_space<vmem>>, vector<1x128xf32>
    %35 = vector.broadcast %34 : vector<1x128xf32> to vector<8x128xf32>
    %36 = arith.addf %33, %35 : vector<8x128xf32>
    %37 = math.tanh %36 : vector<8x128xf32>
    %c0_27 = arith.constant 0 : index
    %c0_28 = arith.constant 0 : index
    %38 = vector.load %arg8[%c0_27, %c0_28] : memref<8x128xf32, #tpu.memory_space<vmem>>, vector<8x128xf32>
    tpu.vector_store %arg8[%c0_27, %c0_28], %37 {strides = array<i32>} : memref<8x128xf32, #tpu.memory_space<vmem>>, vector<8x128xf32>,
    return
  }
  func.func @transform_0(%arg0: i32) -> (i32, i32) {
    %c0_i32 = arith.constant 0 : i32
    %c0_i32_0 = arith.constant 0 : i32
    return %arg0, %c0_i32 : i32, i32
  }
  func.func @transform_1(%arg0: i32) -> (i32, i32) {
    %c0_i32 = arith.constant 0 : i32
    %c0_i32_0 = arith.constant 0 : i32
    %c0_i32_1 = arith.constant 0 : i32
    return %c0_i32, %c0_i32_0 : i32, i32
  }
  func.func @transform_2(%arg0: i32) -> (i32, i32) {
    %c0_i32 = arith.constant 0 : i32
    %c0_i32_0 = arith.constant 0 : i32
    %c0_i32_1 = arith.constant 0 : i32
    return %c0_i32, %c0_i32_0 : i32, i32
  }
  func.func @transform_3(%arg0: i32) -> (i32, i32, i32) {
    %c0_i32 = arith.constant 0 : i32
    %c0_i32_0 = arith.constant 0 : i32
    %c0_i32_1 = arith.constant 0 : i32
    %c0_i32_2 = arith.constant 0 : i32
    return %c0_i32, %c0_i32_0, %c0_i32_1 : i32, i32, i32
  }
  func.func @transform_4(%arg0: i32) -> (i32, i32, i32) {
    %c0_i32 = arith.constant 0 : i32
    %c0_i32_0 = arith.constant 0 : i32
    %c0_i32_1 = arith.constant 0 : i32
    %c0_i32_2 = arith.constant 0 : i32
    return %c0_i32, %c0_i32_0, %c0_i32_1 : i32, i32, i32
  }
  func.func @transform_5(%arg0: i32) -> (i32, i32) {
    %c0_i32 = arith.constant 0 : i32
    %c0_i32_0 = arith.constant 0 : i32
    %c0_i32_1 = arith.constant 0 : i32
    return %c0_i32, %c0_i32_0 : i32, i32
  }
  func.func @transform_6(%arg0: i32) -> (i32, i32) {
    %c0_i32 = arith.constant 0 : i32
    %c0_i32_0 = arith.constant 0 : i32
    %c0_i32_1 = arith.constant 0 : i32
    return %c0_i32, %c0_i32_0 : i32, i32
  }
  func.func @transform_7(%arg0: i32) -> (i32, i32) {
    %c0_i32 = arith.constant 0 : i32
    %c0_i32_0 = arith.constant 0 : i32
    return %arg0, %c0_i32 : i32, i32
  }
}

</mosaic_0001>

<llo_original>
// kernel: tpu_custom_call.1
$region0: #{tpu_custom_call.1}
  #allocation0 [shape = 'u32[]', space=smem, size = 0x4, offset = 0x4, fixed_abs, tag = 'smem constant byte address 0x4 - core index']
  #allocation1 [shape = 'u32[72,128]{1,0:T(1,128)}', space=vmem, size = 0x9000, scoped, tag = 'internal scratch']
  %s0 = inlined_call_operand.hbm [shape: bf16[8,128], index: 0, kind: input, shape index: {}]
  %s1 = inlined_call_operand.hbm [shape: bf16[128,128], index: 1, kind: input, shape index: {}]
  %s2 = inlined_call_operand.vmem [shape: f32[1,128], index: 2, kind: input, shape index: {}]
  %s3 = inlined_call_operand.hbm [shape: bf16[2,128,128], index: 3, kind: input, shape index: {}]
  %s4 = inlined_call_operand.vmem [shape: f32[2,1,128], index: 4, kind: input, shape index: {}]
  %s5 = inlined_call_operand.hbm [shape: bf16[128,128], index: 5, kind: input, shape index: {}]
  %s6 = inlined_call_operand.vmem [shape: f32[1,128], index: 6, kind: input, shape index: {}]
  %s7 = inlined_call_operand.hbm [shape: f32[8,128], index: 7, kind: output, shape index: {}]
  %s8 = sld [smem:[#allocation0]]
  $region54: #{tpu_custom_call.1} parent=0
    _
  %s10 = ssub.s32 1, %s8
  %s11 = scalar_select 0, %s10, %s8
  $region1: #{tpu_custom_call.1} parent=0
    #allocation2 [shape = 'u8[2048]{0}', space=vmem, size = 0x800, scoped, tag = 'input window, operand 0, single buffered']
    #allocation3 [shape = 's32[1]{0}', space=sflag, size = 0x4, scoped, tag = 'scoped memory for tpu_custom_call.1']
    #allocation4 [shape = 's32[1]{0}', space=sflag, size = 0x4, scoped, tag = 'scoped memory for tpu_custom_call.1']
    #allocation5 [shape = 'u8[32768]{0}', space=vmem, size = 0x8000, scoped, tag = 'input window, operand 1, single buffered']
    #allocation6 [shape = 's32[1]{0}', space=sflag, size = 0x4, scoped, tag = 'scoped memory for tpu_custom_call.1']
    #allocation7 [shape = 'u8[65536]{0}', space=vmem, size = 0x10000, scoped, tag = 'input window, operand 3, single buffered']
    #allocation8 [shape = 'u8[32768]{0}', space=vmem, size = 0x8000, scoped, tag = 'input window, operand 5, single buffered']
    #allocation9 [shape = 's32[1]{0}', space=sflag, size = 0x4, scoped, tag = 'scoped memory for tpu_custom_call.1']
    #allocation10 [shape = 'u8[4096]{0}', space=vmem, size = 0x1000, scoped, tag = 'output window, operand 0, single buffered']
    %12 = vsyncpa [#allocation3], 0
    %13 = vsyncpa [#allocation6], 0
    %14 = vsyncpa [#allocation9], 0
    %15 = vsyncpa [#allocation4], 0
    // Predicated region
    $region2: #{tpu_custom_call.1} parent=1 // pred_check
      _
    $region3: #{tpu_custom_call.1} parent=1 // pred_check_branch
      %17 = sbr.rel (0) target = $region5
    $region4: #{tpu_custom_call.1} parent=1 // pred_region
      %19 = vsyncadd [#allocation3], 0
      %s21 = sshll.u32 %s0, 4
      %s22 = int_to_ptr.hbm [resolvable:$true] %s21
      %s23 = sshll.u32 [#allocation2], 4
      %s24 = int_to_ptr.vmem [resolvable:$true] %s23
      %26 = dma.hbm_to_vmem [thread:$0]  %s22, 64, %s24, [#allocation3]
    $region5: #{tpu_custom_call.1} parent=1 // pred_fallthru
      _
    // Predicated region
    $region6: #{tpu_custom_call.1} parent=1 // pred_check
      _
    $region7: #{tpu_custom_call.1} parent=1 // pred_check_branch
      %28 = sbr.rel (0) target = $region9
    $region8: #{tpu_custom_call.1} parent=1 // pred_region
      %30 = vsyncadd [#allocation6], 0
      %s31 = sshll.u32 %s1, 4
      %s32 = int_to_ptr.hbm [resolvable:$true] %s31
      %s33 = sshll.u32 [#allocation5], 4
      %s34 = int_to_ptr.vmem [resolvable:$true] %s33
      %39 = dma.hbm_to_vmem [thread:$0]  %s32, 1024, %s34, [#allocation6], 64, 64, 4
    $region9: #{tpu_custom_call.1} parent=1 // pred_fallthru
      _
    // Predicated region
    $region10: #{tpu_custom_call.1} parent=1 // pred_check
      _
    $region11: #{tpu_custom_call.1} parent=1 // pred_check_branch
      %41 = sbr.rel (0) target = $region13
    $region12: #{tpu_custom_call.1} parent=1 // pred_region
      _
    $region13: #{tpu_custom_call.1} parent=1 // pred_fallthru
      _
    // Predicated region
    $region14: #{tpu_custom_call.1} parent=1 // pred_check
      _
    $region15: #{tpu_custom_call.1} parent=1 // pred_check_branch
      %43 = sbr.rel (0) target = $region17
    $region16: #{tpu_custom_call.1} parent=1 // pred_region
      %45 = vsyncadd [#allocation6], 0
      %s46 = sshll.u32 %s3, 4
      %s47 = int_to_ptr.hbm [resolvable:$true] %s46
      %s48 = sshll.u32 [#allocation7], 4
      %s49 = int_to_ptr.vmem [resolvable:$true] %s48
      %54 = dma.hbm_to_vmem [thread:$0]  %s47, 2048, %s49, [#allocation6], 64, 64, 4
    $region17: #{tpu_custom_call.1} parent=1 // pred_fallthru
      _
    // Predicated region
    $region18: #{tpu_custom_call.1} parent=1 // pred_check
      _
    $region19: #{tpu_custom_call.1} parent=1 // pred_check_branch
      %56 = sbr.rel (0) target = $region21
    $region20: #{tpu_custom_call.1} parent=1 // pred_region
      _
    $region21: #{tpu_custom_call.1} parent=1 // pred_fallthru
      _
    // Predicated region
    $region22: #{tpu_custom_call.1} parent=1 // pred_check
      _
    $region23: #{tpu_custom_call.1} parent=1 // pred_check_branch
      %58 = sbr.rel (0) target = $region25
    $region24: #{tpu_custom_call.1} parent=1 // pred_region
      %60 = vsyncadd [#allocation9], 0
      %s61 = sshll.u32 %s5, 4
      %s62 = int_to_ptr.hbm [resolvable:$true] %s61
      %s63 = sshll.u32 [#allocation8], 4
      %s64 = int_to_ptr.vmem [resolvable:$true] %s63
      %69 = dma.hbm_to_vmem [thread:$0]  %s62, 1024, %s64, [#allocation9], 64, 64, 4
    $region25: #{tpu_custom_call.1} parent=1 // pred_fallthru
      _
    // Predicated region
    $region26: #{tpu_custom_call.1} parent=1 // pred_check
      _
    $region27: #{tpu_custom_call.1} parent=1 // pred_check_branch
      %71 = sbr.rel (0) target = $region29
    $region28: #{tpu_custom_call.1} parent=1 // pred_region
      _
    $region29: #{tpu_custom_call.1} parent=1 // pred_fallthru
      _
    // Predicated region
    $region30: #{tpu_custom_call.1} parent=1 // pred_check
      _
    $region31: #{tpu_custom_call.1} parent=1 // pred_check_branch
      %73 = sbr.rel (0) target = $region33
    $region32: #{tpu_custom_call.1} parent=1 // pred_region
      %75 = dma.done [#allocation3], 64
    $region33: #{tpu_custom_call.1} parent=1 // pred_fallthru
      _
    // Predicated region
    $region34: #{tpu_custom_call.1} parent=1 // pred_check
      _
    $region35: #{tpu_custom_call.1} parent=1 // pred_check_branch
      %77 = sbr.rel (0) target = $region37
    $region36: #{tpu_custom_call.1} parent=1 // pred_region
      %79 = dma.done [#allocation6], 1024
    $region37: #{tpu_custom_call.1} parent=1 // pred_fallthru
      _
    // Predicated region
    $region38: #{tpu_custom_call.1} parent=1 // pred_check
      _
    $region39: #{tpu_custom_call.1} parent=1 // pred_check_branch
      %81 = sbr.rel (0) target = $region41
    $region40: #{tpu_custom_call.1} parent=1 // pred_region
      %83 = dma.done [#allocation6], 2048
    $region41: #{tpu_custom_call.1} parent=1 // pred_fallthru
      _
    // Predicated region
    $region42: #{tpu_custom_call.1} parent=1 // pred_check
      _
    $region43: #{tpu_custom_call.1} parent=1 // pred_check_branch
      %85 = sbr.rel (0) target = $region45
    $region44: #{tpu_custom_call.1} parent=1 // pred_region
      %87 = dma.done [#allocation9], 1024
    $region45: #{tpu_custom_call.1} parent=1 // pred_fallthru
      _
    %v88 = vld [vmem:[#allocation2] sm:$0xf]
    %v89 = vld [vmem:[#allocation5] sm:$0xf]
    %v90 = vld [vmem:[#allocation5 + $0x4] sm:$0xf]
    %v91 = vld [vmem:[#allocation5 + $0x8] sm:$0xf]
    %v92 = vld [vmem:[#allocation5 + $0xc] sm:$0xf]
    %v93 = vld [vmem:[#allocation5 + $0x10] sm:$0xf]
    %v94 = vld [vmem:[#allocation5 + $0x14] sm:$0xf]
    %v95 = vld [vmem:[#allocation5 + $0x18] sm:$0xf]
    %v96 = vld [vmem:[#allocation5 + $0x1c] sm:$0xf]
    %v97 = vld [vmem:[#allocation5 + $0x20] sm:$0xf]
    %v98 = vld [vmem:[#allocation5 + $0x24] sm:$0xf]
    %v99 = vld [vmem:[#allocation5 + $0x28] sm:$0xf]
    %v100 = vld [vmem:[#allocation5 + $0x2c] sm:$0xf]
    %v101 = vld [vmem:[#allocation5 + $0x30] sm:$0xf]
    %v102 = vld [vmem:[#allocation5 + $0x34] sm:$0xf]
    %v103 = vld [vmem:[#allocation5 + $0x38] sm:$0xf]
    %v104 = vld [vmem:[#allocation5 + $0x3c] sm:$0xf]
    %v105 = vld [vmem:[%s2] sm:$0x1]
    %v107 = vperm.slane %v105, 0
    %v125 = vunpack.c.l.b16 %v89
    %v126 = vunpack.c.l.b16 %v90
    %v127 = vunpack.c.l.b16 %v91
    %v128 = vunpack.c.l.b16 %v92
    %v129 = vunpack.c.l.b16 %v93
    %v130 = vunpack.c.l.b16 %v94
    %v131 = vunpack.c.l.b16 %v95
    %v132 = vunpack.c.l.b16 %v96
    %v133 = vunpack.c.l.b16 %v97
    %v134 = vunpack.c.l.b16 %v98
    %v135 = vunpack.c.l.b16 %v99
    %v136 = vunpack.c.l.b16 %v100
    %v137 = vunpack.c.l.b16 %v101
    %v138 = vunpack.c.l.b16 %v102
    %v139 = vunpack.c.l.b16 %v103
    %v140 = vunpack.c.l.b16 %v104
    %v141 = vpack.c.b16 %v126, %v125
    %v142 = vpack.c.b16 %v128, %v127
    %v143 = vpack.c.b16 %v130, %v129
    %v144 = vpack.c.b16 %v132, %v131
    %v145 = vpack.c.b16 %v134, %v133
    %v146 = vpack.c.b16 %v136, %v135
    %v147 = vpack.c.b16 %v138, %v137
    %v148 = vpack.c.b16 %v140, %v139
    %157 = vmatpush.bf16.msra.mxu0 %v148
    %158 = vmatpush.bf16.msra.mxu0 %v147
    %159 = vmatpush.bf16.msra.mxu0 %v146
    %160 = vmatpush.bf16.msra.mxu0 %v145
    %161 = vmatpush.bf16.msra.mxu0 %v144
    %162 = vmatpush.bf16.msra.mxu0 %v143
    %163 = vmatpush.bf16.msra.mxu0 %v142
    %164 = vmatpush.bf16.msra.mxu0 %v141
    %165 = vmatmul.bf16.gmra.mxu0 %v88
    %v166 = vpop.f32.mrf.mxu0
    %v167 = vadd.f32 %v107, %v166
    %v168 = vpop.f32.mrf.mxu0
    %169 = vdwg.mxu0
    %vm170 = vcmp.gt.f32.partialorder %v167, 0.0
    %v171 = vmul.f32 %v167, 0.01
    %v172 = vsel %vm170, %v167, %v171
    %v173 = vpack.c.bf16 %v172, %v172
    %v174 = vld [vmem:[#allocation7] sm:$0xf]
    %v175 = vld [vmem:[#allocation7 + $0x4] sm:$0xf]
    %v176 = vld [vmem:[#allocation7 + $0x8] sm:$0xf]
    %v177 = vld [vmem:[#allocation7 + $0xc] sm:$0xf]
    %v178 = vld [vmem:[#allocation7 + $0x10] sm:$0xf]
    %v179 = vld [vmem:[#allocation7 + $0x14] sm:$0xf]
    %v180 = vld [vmem:[#allocation7 + $0x18] sm:$0xf]
    %v181 = vld [vmem:[#allocation7 + $0x1c] sm:$0xf]
    %v182 = vld [vmem:[#allocation7 + $0x20] sm:$0xf]
    %v183 = vld [vmem:[#allocation7 + $0x24] sm:$0xf]
    %v184 = vld [vmem:[#allocation7 + $0x28] sm:$0xf]
    %v185 = vld [vmem:[#allocation7 + $0x2c] sm:$0xf]
    %v186 = vld [vmem:[#allocation7 + $0x30] sm:$0xf]
    %v187 = vld [vmem:[#allocation7 + $0x34] sm:$0xf]
    %v188 = vld [vmem:[#allocation7 + $0x38] sm:$0xf]
    %v189 = vld [vmem:[#allocation7 + $0x3c] sm:$0xf]
    %v190 = vld [vmem:[%s4] sm:$0x1]
    %v192 = vperm.slane %v190, 0
    %v210 = vunpack.c.l.b16 %v174
    %v211 = vunpack.c.l.b16 %v175
    %v212 = vunpack.c.l.b16 %v176
    %v213 = vunpack.c.l.b16 %v177
    %v214 = vunpack.c.l.b16 %v178
    %v215 = vunpack.c.l.b16 %v179
    %v216 = vunpack.c.l.b16 %v180
    %v217 = vunpack.c.l.b16 %v181
    %v218 = vunpack.c.l.b16 %v182
    %v219 = vunpack.c.l.b16 %v183
    %v220 = vunpack.c.l.b16 %v184
    %v221 = vunpack.c.l.b16 %v185
    %v222 = vunpack.c.l.b16 %v186
    %v223 = vunpack.c.l.b16 %v187
    %v224 = vunpack.c.l.b16 %v188
    %v225 = vunpack.c.l.b16 %v189
    %v226 = vpack.c.b16 %v211, %v210
    %v227 = vpack.c.b16 %v213, %v212
    %v228 = vpack.c.b16 %v215, %v214
    %v229 = vpack.c.b16 %v217, %v216
    %v230 = vpack.c.b16 %v219, %v218
    %v231 = vpack.c.b16 %v221, %v220
    %v232 = vpack.c.b16 %v223, %v222
    %v233 = vpack.c.b16 %v225, %v224
    %242 = vmatpush.bf16.msra.mxu0 %v233
    %243 = vmatpush.bf16.msra.mxu0 %v232
    %244 = vmatpush.bf16.msra.mxu0 %v231
    %245 = vmatpush.bf16.msra.mxu0 %v230
    %246 = vmatpush.bf16.msra.mxu0 %v229
    %247 = vmatpush.bf16.msra.mxu0 %v228
    %248 = vmatpush.bf16.msra.mxu0 %v227
    %249 = vmatpush.bf16.msra.mxu0 %v226
    %250 = vmatmul.bf16.gmra.mxu0 %v173
    %v251 = vpop.f32.mrf.mxu0
    %v252 = vadd.f32 %v192, %v251
    %v253 = vpop.f32.mrf.mxu0
    %254 = vdwg.mxu0
    %v255 = vmax.f32 %v252, 0.0
    %v256 = vpack.c.bf16 %v255, %v255
    %s257 = scalar_lea.vmem [#allocation7], 64
    %v258 = vld [vmem:[%s257] sm:$0xf]
    %v259 = vld [vmem:[%s257 + $0x4] sm:$0xf]
    %v260 = vld [vmem:[%s257 + $0x8] sm:$0xf]
    %v261 = vld [vmem:[%s257 + $0xc] sm:$0xf]
    %v262 = vld [vmem:[%s257 + $0x10] sm:$0xf]
    %v263 = vld [vmem:[%s257 + $0x14] sm:$0xf]
    %v264 = vld [vmem:[%s257 + $0x18] sm:$0xf]
    %v265 = vld [vmem:[%s257 + $0x1c] sm:$0xf]
    %v266 = vld [vmem:[%s257 + $0x20] sm:$0xf]
    %v267 = vld [vmem:[%s257 + $0x24] sm:$0xf]
    %v268 = vld [vmem:[%s257 + $0x28] sm:$0xf]
    %v269 = vld [vmem:[%s257 + $0x2c] sm:$0xf]
    %v270 = vld [vmem:[%s257 + $0x30] sm:$0xf]
    %v271 = vld [vmem:[%s257 + $0x34] sm:$0xf]
    %v272 = vld [vmem:[%s257 + $0x38] sm:$0xf]
    %v273 = vld [vmem:[%s257 + $0x3c] sm:$0xf]
    %s274 = scalar_lea.vmem %s4, 1
    %v275 = vld [vmem:[%s274] sm:$0x1]
    %v277 = vperm.slane %v275, 0
    %v295 = vunpack.c.l.b16 %v258
    %v296 = vunpack.c.l.b16 %v259
    %v297 = vunpack.c.l.b16 %v260
    %v298 = vunpack.c.l.b16 %v261
    %v299 = vunpack.c.l.b16 %v262
    %v300 = vunpack.c.l.b16 %v263
    %v301 = vunpack.c.l.b16 %v264
    %v302 = vunpack.c.l.b16 %v265
    %v303 = vunpack.c.l.b16 %v266
    %v304 = vunpack.c.l.b16 %v267
    %v305 = vunpack.c.l.b16 %v268
    %v306 = vunpack.c.l.b16 %v269
    %v307 = vunpack.c.l.b16 %v270
    %v308 = vunpack.c.l.b16 %v271
    %v309 = vunpack.c.l.b16 %v272
    %v310 = vunpack.c.l.b16 %v273
    %v311 = vpack.c.b16 %v296, %v295
    %v312 = vpack.c.b16 %v298, %v297
    %v313 = vpack.c.b16 %v300, %v299
    %v314 = vpack.c.b16 %v302, %v301
    %v315 = vpack.c.b16 %v304, %v303
    %v316 = vpack.c.b16 %v306, %v305
    %v317 = vpack.c.b16 %v308, %v307
    %v318 = vpack.c.b16 %v310, %v309
    %327 = vmatpush.bf16.msra.mxu0 %v318
    %328 = vmatpush.bf16.msra.mxu0 %v317
    %329 = vmatpush.bf16.msra.mxu0 %v316
    %330 = vmatpush.bf16.msra.mxu0 %v315
    %331 = vmatpush.bf16.msra.mxu0 %v314
    %332 = vmatpush.bf16.msra.mxu0 %v313
    %333 = vmatpush.bf16.msra.mxu0 %v312
    %334 = vmatpush.bf16.msra.mxu0 %v311
    %335 = vmatmul.bf16.gmra.mxu0 %v256
    %v336 = vpop.f32.mrf.mxu0
    %v337 = vadd.f32 %v277, %v336
    %v338 = vpop.f32.mrf.mxu0
    %339 = vdwg.mxu0
    %v340 = vmax.f32 %v337, 0.0
    %v341 = vpack.c.bf16 %v340, %v340
    %v342 = vld [vmem:[#allocation8] sm:$0xf]
    %v343 = vld [vmem:[#allocation8 + $0x4] sm:$0xf]
    %v344 = vld [vmem:[#allocation8 + $0x8] sm:$0xf]
    %v345 = vld [vmem:[#allocation8 + $0xc] sm:$0xf]
    %v346 = vld [vmem:[#allocation8 + $0x10] sm:$0xf]
    %v347 = vld [vmem:[#allocation8 + $0x14] sm:$0xf]
    %v348 = vld [vmem:[#allocation8 + $0x18] sm:$0xf]
    %v349 = vld [vmem:[#allocation8 + $0x1c] sm:$0xf]
    %v350 = vld [vmem:[#allocation8 + $0x20] sm:$0xf]
    %v351 = vld [vmem:[#allocation8 + $0x24] sm:$0xf]
    %v352 = vld [vmem:[#allocation8 + $0x28] sm:$0xf]
    %v353 = vld [vmem:[#allocation8 + $0x2c] sm:$0xf]
    %v354 = vld [vmem:[#allocation8 + $0x30] sm:$0xf]
    %v355 = vld [vmem:[#allocation8 + $0x34] sm:$0xf]
    %v356 = vld [vmem:[#allocation8 + $0x38] sm:$0xf]
    %v357 = vld [vmem:[#allocation8 + $0x3c] sm:$0xf]
    %v358 = vld [vmem:[%s6] sm:$0x1]
    %v360 = vperm.slane %v358, 0
    %v378 = vunpack.c.l.b16 %v342
    %v379 = vunpack.c.l.b16 %v343
    %v380 = vunpack.c.l.b16 %v344
    %v381 = vunpack.c.l.b16 %v345
    %v382 = vunpack.c.l.b16 %v346
    %v383 = vunpack.c.l.b16 %v347
    %v384 = vunpack.c.l.b16 %v348
    %v385 = vunpack.c.l.b16 %v349
    %v386 = vunpack.c.l.b16 %v350
    %v387 = vunpack.c.l.b16 %v351
    %v388 = vunpack.c.l.b16 %v352
    %v389 = vunpack.c.l.b16 %v353
    %v390 = vunpack.c.l.b16 %v354
    %v391 = vunpack.c.l.b16 %v355
    %v392 = vunpack.c.l.b16 %v356
    %v393 = vunpack.c.l.b16 %v357
    %v394 = vpack.c.b16 %v379, %v378
    %v395 = vpack.c.b16 %v381, %v380
    %v396 = vpack.c.b16 %v383, %v382
    %v397 = vpack.c.b16 %v385, %v384
    %v398 = vpack.c.b16 %v387, %v386
    %v399 = vpack.c.b16 %v389, %v388
    %v400 = vpack.c.b16 %v391, %v390
    %v401 = vpack.c.b16 %v393, %v392
    %410 = vmatpush.bf16.msra.mxu0 %v401
    %411 = vmatpush.bf16.msra.mxu0 %v400
    %412 = vmatpush.bf16.msra.mxu0 %v399
    %413 = vmatpush.bf16.msra.mxu0 %v398
    %414 = vmatpush.bf16.msra.mxu0 %v397
    %415 = vmatpush.bf16.msra.mxu0 %v396
    %416 = vmatpush.bf16.msra.mxu0 %v395
    %417 = vmatpush.bf16.msra.mxu0 %v394
    %418 = vmatmul.bf16.gmra.mxu0 %v341
    %v419 = vpop.f32.mrf.mxu0
    %v420 = vadd.f32 %v360, %v419
    %v421 = vpop.f32.mrf.mxu0
    %422 = vdwg.mxu0
    %v423 = vtanh.pop %v420
    %424 = vst [vmem:[#allocation10] sm:$0xff] %v423
    // Predicated region
    $region46: #{tpu_custom_call.1} parent=1 // pred_check
      _
    $region47: #{tpu_custom_call.1} parent=1 // pred_check_branch
      %426 = sbr.rel (0) target = $region49
    $region48: #{tpu_custom_call.1} parent=1 // pred_region
      %428 = vsyncadd [#allocation4], 0
      %s430 = sshll.u32 [#allocation10], 4
      %s431 = int_to_ptr.vmem [resolvable:$true] %s430
      %s432 = sshll.u32 %s7, 4
      %s433 = int_to_ptr.hbm [resolvable:$true] %s432
      %435 = dma.vmem_to_hbm [thread:$0]  %s431, 128, %s433, [#allocation4]
    $region49: #{tpu_custom_call.1} parent=1 // pred_fallthru
      _
    // Predicated region
    $region50: #{tpu_custom_call.1} parent=1 // pred_check
      _
    $region51: #{tpu_custom_call.1} parent=1 // pred_check_branch
      %437 = sbr.rel (0) target = $region53
    $region52: #{tpu_custom_call.1} parent=1 // pred_region
      %439 = dma.done [#allocation4], 128
    $region53: #{tpu_custom_call.1} parent=1 // pred_fallthru
      _
    %440 = vsyncpa [#allocation3], 1
    %441 = vsyncpa [#allocation6], 1
    %442 = vsyncpa [#allocation9], 1
    %443 = vsyncpa [#allocation4], 1

</llo_original>
